<compile_context>
chip_gen: v7x
topology: tpu7x:2x2x1
jax: 0.10.0
libtpu: 0.0.40
codegen_flags: <defaults>
</compile_context>

<pallas_src>
import jax
import jax.numpy as jnp
from jax.experimental import pallas as pl
from jax.experimental.pallas import tpu as pltpu


def _round_up(x, m):
    return ((x + m - 1) // m) * m


def _decode_kernel(z_ref, w_ref, b_ref, o_ref):
    # z_ref: (TN, z_dim) bf16   w_ref: (z_dim, TD) bf16
    # b_ref: (1, TD)  f32       o_ref: (TN, TD)    f32
    acc = jnp.dot(z_ref[...], w_ref[...], preferred_element_type=jnp.float32)
    acc = acc + b_ref[...]                      # broadcast bias over batch
    o_ref[...] = jax.nn.sigmoid(acc).astype(o_ref.dtype)


def _pick_td(d):
    # Largest lane-dense tile that divides D; capped at 2048 so two buffers of
    # (W tile + bias + output tile) stay far below v7x's 32 MiB scoped VMEM.
    for cand in (2048, 1024, 512, 256, 128):
        if d % cand == 0:
            return cand
    return d  # full-extent fallback (always a legal block shape)


def net_gen_decode(z, w, b, out_chw, *, tn=None, td=None):
    """decode(z): Linear(z_dim -> C*H*W) + sigmoid, reshaped to NCHW."""
    n, z_dim = z.shape
    d = w.shape[1]
    c, hh, ww = out_chw
    assert c * hh * ww == d

    # ---- batch tiling (pad N up to the tile size) -------------------------
    if tn is None:
        tn = 128 if n >= 128 else _round_up(max(n, 8), 8)
    n_pad = _round_up(n, tn)
    if n_pad != n:
        z = jnp.pad(z, ((0, n_pad - n), (0, 0)))

    # ---- feature (D) tiling ----------------------------------------------
    if td is None:
        td = _pick_td(d)
    assert d % td == 0

    # bf16 operands for the MXU; f32 accumulation inside the kernel.
    z_bf16 = z.astype(jnp.bfloat16)
    w_bf16 = w.astype(jnp.bfloat16)
    b_f32 = b.astype(jnp.float32)

    grid = (n_pad // tn, d // td)

    cost = pl.CostEstimate(
        flops=2 * n_pad * z_dim * d,
        transcendentals=n_pad * d,                       # sigmoid exp
        bytes_accessed=(n_pad * z_dim * 2                # z (bf16)
                        + z_dim * d * 2                  # W (bf16)
                        + d * 4                          # bias (f32)
                        + n_pad * d * 4),                # output (f32)
    )

    flat = pl.pallas_call(
        _decode_kernel,
        out_shape=jax.ShapeDtypeStruct((n_pad, d), jnp.float32),
        grid=grid,
        in_specs=[
            pl.BlockSpec((tn, z_dim), lambda i, j: (i, 0)),
            pl.BlockSpec((z_dim, td), lambda i, j: (0, j)),
            pl.BlockSpec((1, td), lambda i, j: (0, j)),
        ],
        out_specs=pl.BlockSpec((tn, td), lambda i, j: (i, j)),
        compiler_params=pltpu.CompilerParams(
            dimension_semantics=("parallel", "parallel")),
        cost_estimate=cost,
    )(z_bf16, w_bf16, b_f32)

    return flat[:n].reshape(n, c, hh, ww)


class NetGenBasePallas:
    """JAX/Pallas counterpart of NetGenBase."""

    def __init__(self, z_dim, out_chw=(4, 16, 16), key=None):
        self.z_dim = z_dim
        self.out_chw = out_chw
        d = out_chw[0] * out_chw[1] * out_chw[2]
        if key is None:
            key = jax.random.PRNGKey(0)
        kw, kb = jax.random.split(key)
        bound = 1.0 / (z_dim ** 0.5)
        # Weights stored in bf16 (halves HBM streaming traffic); bias in f32.
        self.w = jax.random.uniform(
            kw, (z_dim, d), jnp.float32, -bound, bound).astype(jnp.bfloat16)
        self.b = jax.random.uniform(kb, (1, d), jnp.float32, -bound, bound)

    def decode(self, z):
        return net_gen_decode(z, self.w, self.b, self.out_chw)

    def forward(self, z):
        return self.decode(z)

    def __call__(self, z):
        return self.forward(z)

    def sample(self, num_samples, key):
        z = jax.random.normal(key, (num_samples, self.z_dim), jnp.float32)
        return self.decode(z)

    def generate(self, z):
        return self.decode(z)


def _ref_decode(z, w_bf16, b, out_chw):
    # Same bf16-input / f32-accumulate arithmetic as the kernel.
    acc = jnp.dot(z.astype(jnp.bfloat16), w_bf16,
                  preferred_element_type=jnp.float32)
    return jax.nn.sigmoid(acc + b.astype(jnp.float32)).reshape(
        z.shape[0], *out_chw)


if __name__ == "__main__":
    key = jax.random.PRNGKey(0)
    k_param, k_z, k_s, k_param2, k_z2 = jax.random.split(key, 5)

    # ---- small canonical shape: batch=2, z_dim=32, out=(4,16,16) ----------
    z_dim = 32
    batch = 2
    net = NetGenBasePallas(z_dim, out_chw=(4, 16, 16), key=k_param)
    z = jax.random.normal(k_z, (batch, z_dim), jnp.float32)

    out = net(z)                          # forward == decode
    out = jax.block_until_ready(out)
    assert out.shape == (batch, 4, 16, 16)

    samples = net.sample(2, k_s)          # sample path also hits the kernel
    samples = jax.block_until_ready(samples)
    assert samples.shape == (2, 4, 16, 16)

    ref = _ref_decode(z, net.w, net.b, net.out_chw)
    assert jnp.allclose(out, ref, atol=1e-3, rtol=1e-3)

    # ---- larger shape: exercises multiple D-tiles (real 2-D grid) ---------
    net2 = NetGenBasePallas(z_dim, out_chw=(8, 32, 32), key=k_param2)
    z2 = jax.random.normal(k_z2, (16, z_dim), jnp.float32)
    out2 = jax.block_until_ready(net2(z2))
    assert out2.shape == (16, 8, 32, 32)
    ref2 = _ref_decode(z2, net2.w, net2.b, net2.out_chw)
    assert jnp.allclose(out2, ref2, atol=1e-3, rtol=1e-3)

    print("KERNEL_OK")
</pallas_src>

<mosaic_0001>
module attributes {stable_mosaic.version = 11 : i64} {
  func.func @_decode_kernel(%arg0: i32, %arg1: i32, %arg2: memref<8x32xbf16, #tpu.memory_space<vmem>>, %arg3: memref<32x1024xbf16, #tpu.memory_space<vmem>>, %arg4: memref<1x1024xf32, #tpu.memory_space<vmem>>, %arg5: memref<8x1024xf32, #tpu.memory_space<vmem>>) attributes {dimension_semantics = [#tpu.dimension_semantics<parallel>, #tpu.dimension_semantics<parallel>], iteration_bounds = array<i64: 1, 1>, scalar_prefetch = 0 : i64, scratch_operands = 0 : i64, tpu.core_type = #tpu.core_type<tc>, window_params = [{transform_indices = @transform_0, window_bounds = array<i64: 8, 32>}, {transform_indices = @transform_1, window_bounds = array<i64: 32, 1024>}, {transform_indices = @transform_2, window_bounds = array<i64: 1, 1024>}, {transform_indices = @transform_3, window_bounds = array<i64: 8, 1024>}]} {
    %c0 = arith.constant 0 : index
    %c0_0 = arith.constant 0 : index
    %0 = vector.load %arg2[%c0, %c0_0] : memref<8x32xbf16, #tpu.memory_space<vmem>>, vector<8x32xbf16>
    %c0_1 = arith.constant 0 : index
    %c0_2 = arith.constant 0 : index
    %1 = vector.load %arg3[%c0_1, %c0_2] : memref<32x1024xbf16, #tpu.memory_space<vmem>>, vector<32x1024xbf16>
    %cst = arith.constant dense<0.000000e+00> : vector<8x1024xf32>
    %2 = tpu.matmul %0, %1, %cst {dimension_numbers = #tpu.dot_dimension_numbers<[1], [0], [0], [1], [0, 0, 1, 1], [], []>} : vector<8x32xbf16>, vector<32x1024xbf16>, vector<8x1024xf32> -> vector<8x1024xf32>
    %c0_3 = arith.constant 0 : index
    %c0_4 = arith.constant 0 : index
    %3 = vector.load %arg4[%c0_3, %c0_4] : memref<1x1024xf32, #tpu.memory_space<vmem>>, vector<1x1024xf32>
    %4 = vector.broadcast %3 : vector<1x1024xf32> to vector<8x1024xf32>
    %5 = arith.addf %2, %4 : vector<8x1024xf32>
    %6 = arith.negf %5 : vector<8x1024xf32>
    %7 = math.exp %6 : vector<8x1024xf32>
    %cst_5 = arith.constant 1.000000e+00 : f32
    %8 = vector.broadcast %cst_5 : f32 to vector<8x1024xf32>
    %9 = arith.addf %8, %7 : vector<8x1024xf32>
    %10 = arith.divf %8, %9 : vector<8x1024xf32>
    %c0_6 = arith.constant 0 : index
    %c0_7 = arith.constant 0 : index
    %11 = vector.load %arg5[%c0_6, %c0_7] : memref<8x1024xf32, #tpu.memory_space<vmem>>, vector<8x1024xf32>
    tpu.vector_store %arg5[%c0_6, %c0_7], %10 {strides = array<i32>} : memref<8x1024xf32, #tpu.memory_space<vmem>>, vector<8x1024xf32>,
    return
  }
  func.func @transform_0(%arg0: i32, %arg1: i32) -> (i32, i32) {
    %c0_i32 = arith.constant 0 : i32
    %c0_i32_0 = arith.constant 0 : i32
    return %arg0, %c0_i32 : i32, i32
  }
  func.func @transform_1(%arg0: i32, %arg1: i32) -> (i32, i32) {
    %c0_i32 = arith.constant 0 : i32
    %c0_i32_0 = arith.constant 0 : i32
    return %c0_i32, %arg1 : i32, i32
  }
  func.func @transform_2(%arg0: i32, %arg1: i32) -> (i32, i32) {
    %c0_i32 = arith.constant 0 : i32
    %c0_i32_0 = arith.constant 0 : i32
    return %c0_i32, %arg1 : i32, i32
  }
  func.func @transform_3(%arg0: i32, %arg1: i32) -> (i32, i32) {
    %c0_i32 = arith.constant 0 : i32
    return %arg0, %arg1 : i32, i32
  }
}

</mosaic_0001>

<llo_original>
// kernel: tpu_custom_call.1
$region0: #{tpu_custom_call.1}
  #allocation0 [shape = 'u32[]', space=smem, size = 0x4, offset = 0x4, fixed_abs, tag = 'smem constant byte address 0x4 - core index']
  #allocation1 [shape = 'u32[144,128]{1,0:T(1,128)}', space=vmem, size = 0x12000, scoped, tag = 'internal scratch']
  %s0 = inlined_call_operand.hbm [shape: bf16[8,32], index: 0, kind: input, shape index: {}]
  %s1 = inlined_call_operand.hbm [shape: bf16[32,1024], index: 1, kind: input, shape index: {}]
  %s2 = inlined_call_operand.hbm [shape: f32[1,1024], index: 2, kind: input, shape index: {}]
  %s3 = inlined_call_operand.hbm [shape: f32[8,1024], index: 3, kind: output, shape index: {}]
  %s4 = sld [smem:[#allocation0]]
  $region34: #{tpu_custom_call.1} parent=0
    _
  %s6 = ssub.s32 1, %s4
  %s7 = scalar_select 0, %s6, %s4
  $region1: #{tpu_custom_call.1} parent=0
    #allocation2 [shape = 'u8[2048]{0}', space=vmem, size = 0x800, scoped, tag = 'input window, operand 0, single buffered']
    #allocation3 [shape = 's32[1]{0}', space=sflag, size = 0x4, scoped, tag = 'scoped memory for tpu_custom_call.1']
    #allocation4 [shape = 's32[1]{0}', space=sflag, size = 0x4, scoped, tag = 'scoped memory for tpu_custom_call.1']
    #allocation5 [shape = 'u8[65536]{0}', space=vmem, size = 0x10000, scoped, tag = 'input window, operand 1, single buffered']
    #allocation6 [shape = 's32[1]{0}', space=sflag, size = 0x4, scoped, tag = 'scoped memory for tpu_custom_call.1']
    #allocation7 [shape = 'u8[4096]{0}', space=vmem, size = 0x1000, scoped, tag = 'input window, operand 2, single buffered']
    #allocation8 [shape = 'u8[32768]{0}', space=vmem, size = 0x8000, scoped, tag = 'output window, operand 0, single buffered']
    %8 = vsyncpa [#allocation3], 0
    %9 = vsyncpa [#allocation6], 0
    %10 = vsyncpa [#allocation4], 0
    // Predicated region
    $region2: #{tpu_custom_call.1} parent=1 // pred_check
      _
    $region3: #{tpu_custom_call.1} parent=1 // pred_check_branch
      %12 = sbr.rel (0) target = $region5
    $region4: #{tpu_custom_call.1} parent=1 // pred_region
      %s14 = ssub.s32 64, 64
      %15 = vsyncadd [#allocation3], %s14
      %s17 = sshll.u32 [#allocation2], 4
      %s18 = int_to_ptr.vmem [resolvable:$true] %s17
      %20 = dma.hbm_to_vmem [thread:$0]  %s0, 64, %s18, [#allocation3]
    $region5: #{tpu_custom_call.1} parent=1 // pred_fallthru
      _
    // Predicated region
    $region6: #{tpu_custom_call.1} parent=1 // pred_check
      _
    $region7: #{tpu_custom_call.1} parent=1 // pred_check_branch
      %22 = sbr.rel (0) target = $region9
    $region8: #{tpu_custom_call.1} parent=1 // pred_region
      %s24 = ssub.s32 2048, 2048
      %25 = vsyncadd [#allocation6], %s24
      %s26 = sshll.u32 [#allocation5], 4
      %s27 = int_to_ptr.vmem [resolvable:$true] %s26
      %32 = dma.hbm_to_vmem [thread:$0]  %s1, 2048, %s27, [#allocation6], 512, 512, 32
    $region9: #{tpu_custom_call.1} parent=1 // pred_fallthru
      _
    // Predicated region
    $region10: #{tpu_custom_call.1} parent=1 // pred_check
      _
    $region11: #{tpu_custom_call.1} parent=1 // pred_check_branch
      %34 = sbr.rel (0) target = $region13
    $region12: #{tpu_custom_call.1} parent=1 // pred_region
      %s36 = ssub.s32 128, 128
      %37 = vsyncadd [#allocation6], %s36
      %s39 = sshll.u32 [#allocation7], 4
      %s40 = int_to_ptr.vmem [resolvable:$true] %s39
      %42 = dma.hbm_to_vmem [thread:$0]  %s2, 128, %s40, [#allocation6]
    $region13: #{tpu_custom_call.1} parent=1 // pred_fallthru
      _
    // Predicated region
    $region14: #{tpu_custom_call.1} parent=1 // pred_check
      _
    $region15: #{tpu_custom_call.1} parent=1 // pred_check_branch
      %44 = sbr.rel (0) target = $region17
    $region16: #{tpu_custom_call.1} parent=1 // pred_region
      %45 = dma.done [#allocation3], 64
    $region17: #{tpu_custom_call.1} parent=1 // pred_fallthru
      _
    // Predicated region
    $region18: #{tpu_custom_call.1} parent=1 // pred_check
      _
    $region19: #{tpu_custom_call.1} parent=1 // pred_check_branch
      %47 = sbr.rel (0) target = $region21
    $region20: #{tpu_custom_call.1} parent=1 // pred_region
      %48 = dma.done [#allocation6], 2048
    $region21: #{tpu_custom_call.1} parent=1 // pred_fallthru
      _
    // Predicated region
    $region22: #{tpu_custom_call.1} parent=1 // pred_check
      _
    $region23: #{tpu_custom_call.1} parent=1 // pred_check_branch
      %50 = sbr.rel (0) target = $region25
    $region24: #{tpu_custom_call.1} parent=1 // pred_region
      %51 = dma.done [#allocation6], 128
    $region25: #{tpu_custom_call.1} parent=1 // pred_fallthru
      _
    %v53 = vld [vmem:[#allocation2] sm:$0xf]
    %v54 = vld [vmem:[#allocation5] sm:$0xff]
    %v55 = vld [vmem:[#allocation5 + $0x8] sm:$0xff]
    %v56 = vld [vmem:[#allocation5 + $0x10] sm:$0xff]
    %v57 = vld [vmem:[#allocation5 + $0x18] sm:$0xff]
    %v58 = vld [vmem:[#allocation5 + $0x20] sm:$0xff]
    %v59 = vld [vmem:[#allocation5 + $0x28] sm:$0xff]
    %v60 = vld [vmem:[#allocation5 + $0x30] sm:$0xff]
    %v61 = vld [vmem:[#allocation5 + $0x38] sm:$0xff]
    %v62 = vld [vmem:[#allocation5 + $0x40] sm:$0xff]
    %v63 = vld [vmem:[#allocation5 + $0x48] sm:$0xff]
    %v64 = vld [vmem:[#allocation5 + $0x50] sm:$0xff]
    %v65 = vld [vmem:[#allocation5 + $0x58] sm:$0xff]
    %v66 = vld [vmem:[#allocation5 + $0x60] sm:$0xff]
    %v67 = vld [vmem:[#allocation5 + $0x68] sm:$0xff]
    %v68 = vld [vmem:[#allocation5 + $0x70] sm:$0xff]
    %v69 = vld [vmem:[#allocation5 + $0x78] sm:$0xff]
    %v70 = vld [vmem:[#allocation7] sm:$0xff]
    %v72 = vlaneseq
    %v73 = vshrl.u32 %v72, 7
    %v74 = vsub.s32 0, %v73
    %v75 = vrot.slane %v70, %v74
    %v76 = vlaneseq
    %v77 = vshrl.u32 %v76, 7
    %v78 = vsub.s32 1, %v77
    %v79 = vrot.slane %v70, %v78
    %v80 = vlaneseq
    %v81 = vshrl.u32 %v80, 7
    %v82 = vsub.s32 2, %v81
    %v83 = vrot.slane %v70, %v82
    %v84 = vlaneseq
    %v85 = vshrl.u32 %v84, 7
    %v86 = vsub.s32 3, %v85
    %v87 = vrot.slane %v70, %v86
    %v88 = vlaneseq
    %v89 = vshrl.u32 %v88, 7
    %v90 = vsub.s32 4, %v89
    %v91 = vrot.slane %v70, %v90
    %v92 = vlaneseq
    %v93 = vshrl.u32 %v92, 7
    %v94 = vsub.s32 5, %v93
    %v95 = vrot.slane %v70, %v94
    %v96 = vlaneseq
    %v97 = vshrl.u32 %v96, 7
    %v98 = vsub.s32 6, %v97
    %v99 = vrot.slane %v70, %v98
    %v100 = vlaneseq
    %v101 = vshrl.u32 %v100, 7
    %v102 = vsub.s32 7, %v101
    %v103 = vrot.slane %v70, %v102
    %v128 = vunpack.c.l.b16 %v54
    %v129 = vunpack.c.h.b16 %v54
    %v130 = vunpack.c.l.b16 %v55
    %v131 = vunpack.c.h.b16 %v55
    %v132 = vunpack.c.l.b16 %v56
    %v133 = vunpack.c.h.b16 %v56
    %v134 = vunpack.c.l.b16 %v57
    %v135 = vunpack.c.h.b16 %v57
    %v136 = vunpack.c.l.b16 %v58
    %v137 = vunpack.c.h.b16 %v58
    %v138 = vunpack.c.l.b16 %v59
    %v139 = vunpack.c.h.b16 %v59
    %v140 = vunpack.c.l.b16 %v60
    %v141 = vunpack.c.h.b16 %v60
    %v142 = vunpack.c.l.b16 %v61
    %v143 = vunpack.c.h.b16 %v61
    %v144 = vunpack.c.l.b16 %v62
    %v145 = vunpack.c.h.b16 %v62
    %v146 = vunpack.c.l.b16 %v63
    %v147 = vunpack.c.h.b16 %v63
    %v148 = vunpack.c.l.b16 %v64
    %v149 = vunpack.c.h.b16 %v64
    %v150 = vunpack.c.l.b16 %v65
    %v151 = vunpack.c.h.b16 %v65
    %v152 = vunpack.c.l.b16 %v66
    %v153 = vunpack.c.h.b16 %v66
    %v154 = vunpack.c.l.b16 %v67
    %v155 = vunpack.c.h.b16 %v67
    %v156 = vunpack.c.l.b16 %v68
    %v157 = vunpack.c.h.b16 %v68
    %v158 = vunpack.c.l.b16 %v69
    %v159 = vunpack.c.h.b16 %v69
    %v160 = vpack.c.b16 %v136, %v128
    %v161 = vpack.c.b16 %v137, %v129
    %v162 = vpack.c.b16 %v138, %v130
    %v163 = vpack.c.b16 %v139, %v131
    %v164 = vpack.c.b16 %v140, %v132
    %v165 = vpack.c.b16 %v141, %v133
    %v166 = vpack.c.b16 %v142, %v134
    %v167 = vpack.c.b16 %v143, %v135
    %v168 = vpack.c.b16 %v152, %v144
    %v169 = vpack.c.b16 %v153, %v145
    %v170 = vpack.c.b16 %v154, %v146
    %v171 = vpack.c.b16 %v155, %v147
    %v172 = vpack.c.b16 %v156, %v148
    %v173 = vpack.c.b16 %v157, %v149
    %v174 = vpack.c.b16 %v158, %v150
    %v175 = vpack.c.b16 %v159, %v151
    %vm192 = vcmask 261120
    %v194 = vsel %vm192, %v53, 0
    %196 = vmatprep.subr.bf16.mxu0 %v161
    %197 = vmatpush1.bf16.msra.mxu0 %v160
    %198 = vmatprep.subr.bf16.mxu0 %v169
    %199 = vmatpush1.bf16.msra.mxu0 %v168
    %200 = vmatprep.subr.bf16.mxu0 0
    %201 = vmatpush1.bf16.msra.mxu0 0
    %202 = vmatprep.subr.bf16.mxu0 0
    %203 = vmatpush1.bf16.msra.mxu0 0
    %204 = vmatprep.subr.bf16.mxu0 0
    %205 = vmatpush1.bf16.msra.mxu0 0
    %206 = vmatprep.subr.bf16.mxu0 0
    %207 = vmatpush1.bf16.msra.mxu0 0
    %208 = vmatprep.subr.bf16.mxu0 0
    %209 = vmatpush1.bf16.msra.mxu0 0
    %210 = vmatprep.subr.bf16.mxu0 0
    %211 = vmatpush1.bf16.msra.mxu0 0
    %212 = vmatprep.subr.bf16.mxu0 0
    %213 = vmatpush1.bf16.msra.mxu0 0
    %214 = vmatprep.subr.bf16.mxu0 0
    %215 = vmatpush1.bf16.msra.mxu0 0
    %216 = vmatprep.subr.bf16.mxu0 0
    %217 = vmatpush1.bf16.msra.mxu0 0
    %218 = vmatprep.subr.bf16.mxu0 0
    %219 = vmatpush1.bf16.msra.mxu0 0
    %220 = vmatprep.subr.bf16.mxu0 0
    %221 = vmatpush1.bf16.msra.mxu0 0
    %222 = vmatprep.subr.bf16.mxu0 0
    %223 = vmatpush1.bf16.msra.mxu0 0
    %224 = vmatprep.subr.bf16.mxu0 0
    %225 = vmatpush1.bf16.msra.mxu0 0
    %226 = vmatprep.subr.bf16.mxu0 0
    %227 = vmatpush1.bf16.msra.mxu0 0
    %228 = vmatprep.mubr.bf16.mxu0 0
    %229 = vmatmul.mubr.bf16.gmra.mrb[0].mxu0 %v194
    %v230 = vpop.f32.mrb[0].mxu0
    %v231 = vadd.f32 %v75, %v230
    %v232 = vpop.f32.mrb[0].mxu0
    %v233 = vadd.f32 %v79, %v232
    %v234 = vpop.f32.mrb[0].mxu0
    %v235 = vpop.f32.mrb[0].mxu0
    %236 = vdwg.mxu0
    %237 = vmatprep.subr.bf16.mxu0 %v163
    %238 = vmatpush1.bf16.msra.mxu0 %v162
    %239 = vmatprep.subr.bf16.mxu0 %v171
    %240 = vmatpush1.bf16.msra.mxu0 %v170
    %241 = vmatprep.subr.bf16.mxu0 0
    %242 = vmatpush1.bf16.msra.mxu0 0
    %243 = vmatprep.subr.bf16.mxu0 0
    %244 = vmatpush1.bf16.msra.mxu0 0
    %245 = vmatprep.subr.bf16.mxu0 0
    %246 = vmatpush1.bf16.msra.mxu0 0
    %247 = vmatprep.subr.bf16.mxu0 0
    %248 = vmatpush1.bf16.msra.mxu0 0
    %249 = vmatprep.subr.bf16.mxu0 0
    %250 = vmatpush1.bf16.msra.mxu0 0
    %251 = vmatprep.subr.bf16.mxu0 0
    %252 = vmatpush1.bf16.msra.mxu0 0
    %253 = vmatprep.subr.bf16.mxu0 0
    %254 = vmatpush1.bf16.msra.mxu0 0
    %255 = vmatprep.subr.bf16.mxu0 0
    %256 = vmatpush1.bf16.msra.mxu0 0
    %257 = vmatprep.subr.bf16.mxu0 0
    %258 = vmatpush1.bf16.msra.mxu0 0
    %259 = vmatprep.subr.bf16.mxu0 0
    %260 = vmatpush1.bf16.msra.mxu0 0
    %261 = vmatprep.subr.bf16.mxu0 0
    %262 = vmatpush1.bf16.msra.mxu0 0
    %263 = vmatprep.subr.bf16.mxu0 0
    %264 = vmatpush1.bf16.msra.mxu0 0
    %265 = vmatprep.subr.bf16.mxu0 0
    %266 = vmatpush1.bf16.msra.mxu0 0
    %267 = vmatprep.subr.bf16.mxu0 0
    %268 = vmatpush1.bf16.msra.mxu0 0
    %269 = vmatprep.mubr.bf16.mxu0 0
    %270 = vmatmul.mubr.bf16.gmra.mrb[0].mxu0 %v194
    %v271 = vpop.f32.mrb[0].mxu0
    %v272 = vadd.f32 %v83, %v271
    %v273 = vpop.f32.mrb[0].mxu0
    %v274 = vadd.f32 %v87, %v273
    %v275 = vpop.f32.mrb[0].mxu0
    %v276 = vpop.f32.mrb[0].mxu0
    %277 = vdwg.mxu0
    %278 = vmatprep.subr.bf16.mxu0 %v165
    %279 = vmatpush1.bf16.msra.mxu0 %v164
    %280 = vmatprep.subr.bf16.mxu0 %v173
    %281 = vmatpush1.bf16.msra.mxu0 %v172
    %282 = vmatprep.subr.bf16.mxu0 0
    %283 = vmatpush1.bf16.msra.mxu0 0
    %284 = vmatprep.subr.bf16.mxu0 0
    %285 = vmatpush1.bf16.msra.mxu0 0
    %286 = vmatprep.subr.bf16.mxu0 0
    %287 = vmatpush1.bf16.msra.mxu0 0
    %288 = vmatprep.subr.bf16.mxu0 0
    %289 = vmatpush1.bf16.msra.mxu0 0
    %290 = vmatprep.subr.bf16.mxu0 0
    %291 = vmatpush1.bf16.msra.mxu0 0
    %292 = vmatprep.subr.bf16.mxu0 0
    %293 = vmatpush1.bf16.msra.mxu0 0
    %294 = vmatprep.subr.bf16.mxu0 0
    %295 = vmatpush1.bf16.msra.mxu0 0
    %296 = vmatprep.subr.bf16.mxu0 0
    %297 = vmatpush1.bf16.msra.mxu0 0
    %298 = vmatprep.subr.bf16.mxu0 0
    %299 = vmatpush1.bf16.msra.mxu0 0
    %300 = vmatprep.subr.bf16.mxu0 0
    %301 = vmatpush1.bf16.msra.mxu0 0
    %302 = vmatprep.subr.bf16.mxu0 0
    %303 = vmatpush1.bf16.msra.mxu0 0
    %304 = vmatprep.subr.bf16.mxu0 0
    %305 = vmatpush1.bf16.msra.mxu0 0
    %306 = vmatprep.subr.bf16.mxu0 0
    %307 = vmatpush1.bf16.msra.mxu0 0
    %308 = vmatprep.subr.bf16.mxu0 0
    %309 = vmatpush1.bf16.msra.mxu0 0
    %310 = vmatprep.mubr.bf16.mxu0 0
    %311 = vmatmul.mubr.bf16.gmra.mrb[0].mxu0 %v194
    %v312 = vpop.f32.mrb[0].mxu0
    %v313 = vadd.f32 %v91, %v312
    %v314 = vpop.f32.mrb[0].mxu0
    %v315 = vadd.f32 %v95, %v314
    %v316 = vpop.f32.mrb[0].mxu0
    %v317 = vpop.f32.mrb[0].mxu0
    %318 = vdwg.mxu0
    %319 = vmatprep.subr.bf16.mxu0 %v167
    %320 = vmatpush1.bf16.msra.mxu0 %v166
    %321 = vmatprep.subr.bf16.mxu0 %v175
    %322 = vmatpush1.bf16.msra.mxu0 %v174
    %323 = vmatprep.subr.bf16.mxu0 0
    %324 = vmatpush1.bf16.msra.mxu0 0
    %325 = vmatprep.subr.bf16.mxu0 0
    %326 = vmatpush1.bf16.msra.mxu0 0
    %327 = vmatprep.subr.bf16.mxu0 0
    %328 = vmatpush1.bf16.msra.mxu0 0
    %329 = vmatprep.subr.bf16.mxu0 0
    %330 = vmatpush1.bf16.msra.mxu0 0
    %331 = vmatprep.subr.bf16.mxu0 0
    %332 = vmatpush1.bf16.msra.mxu0 0
    %333 = vmatprep.subr.bf16.mxu0 0
    %334 = vmatpush1.bf16.msra.mxu0 0
    %335 = vmatprep.subr.bf16.mxu0 0
    %336 = vmatpush1.bf16.msra.mxu0 0
    %337 = vmatprep.subr.bf16.mxu0 0
    %338 = vmatpush1.bf16.msra.mxu0 0
    %339 = vmatprep.subr.bf16.mxu0 0
    %340 = vmatpush1.bf16.msra.mxu0 0
    %341 = vmatprep.subr.bf16.mxu0 0
    %342 = vmatpush1.bf16.msra.mxu0 0
    %343 = vmatprep.subr.bf16.mxu0 0
    %344 = vmatpush1.bf16.msra.mxu0 0
    %345 = vmatprep.subr.bf16.mxu0 0
    %346 = vmatpush1.bf16.msra.mxu0 0
    %347 = vmatprep.subr.bf16.mxu0 0
    %348 = vmatpush1.bf16.msra.mxu0 0
    %349 = vmatprep.subr.bf16.mxu0 0
    %350 = vmatpush1.bf16.msra.mxu0 0
    %351 = vmatprep.mubr.bf16.mxu0 0
    %352 = vmatmul.mubr.bf16.gmra.mrb[0].mxu0 %v194
    %v353 = vpop.f32.mrb[0].mxu0
    %v354 = vadd.f32 %v99, %v353
    %v355 = vpop.f32.mrb[0].mxu0
    %v356 = vadd.f32 %v103, %v355
    %v357 = vpop.f32.mrb[0].mxu0
    %v358 = vpop.f32.mrb[0].mxu0
    %359 = vdwg.mxu0
    %v360 = vxor.u32 %v231, 2147483648
    %v361 = vxor.u32 %v233, 2147483648
    %v362 = vxor.u32 %v272, 2147483648
    %v363 = vxor.u32 %v274, 2147483648
    %v364 = vxor.u32 %v313, 2147483648
    %v365 = vxor.u32 %v315, 2147483648
    %v366 = vxor.u32 %v354, 2147483648
    %v367 = vxor.u32 %v356, 2147483648
    %v368 = vmul.f32 %v360, 1.442695
    %v369 = vpow.pop %v368
    %v370 = vmul.f32 %v361, 1.442695
    %v371 = vpow.pop %v370
    %v372 = vmul.f32 %v362, 1.442695
    %v373 = vpow.pop %v372
    %v374 = vmul.f32 %v363, 1.442695
    %v375 = vpow.pop %v374
    %v376 = vmul.f32 %v364, 1.442695
    %v377 = vpow.pop %v376
    %v378 = vmul.f32 %v365, 1.442695
    %v379 = vpow.pop %v378
    %v380 = vmul.f32 %v366, 1.442695
    %v381 = vpow.pop %v380
    %v382 = vmul.f32 %v367, 1.442695
    %v383 = vpow.pop %v382
    %v384 = vadd.f32 %v369, 1.0
    %v385 = vadd.f32 %v371, 1.0
    %v386 = vadd.f32 %v373, 1.0
    %v387 = vadd.f32 %v375, 1.0
    %v388 = vadd.f32 %v377, 1.0
    %v389 = vadd.f32 %v379, 1.0
    %v390 = vadd.f32 %v381, 1.0
    %v391 = vadd.f32 %v383, 1.0
    %v392 = vrcp.pop %v384
    %v393 = vmul.f32 1.0, %v392
    %v394 = vrcp.pop %v385
    %v395 = vmul.f32 1.0, %v394
    %v396 = vrcp.pop %v386
    %v397 = vmul.f32 1.0, %v396
    %v398 = vrcp.pop %v387
    %v399 = vmul.f32 1.0, %v398
    %v400 = vrcp.pop %v388
    %v401 = vmul.f32 1.0, %v400
    %v402 = vrcp.pop %v389
    %v403 = vmul.f32 1.0, %v402
    %v404 = vrcp.pop %v390
    %v405 = vmul.f32 1.0, %v404
    %v406 = vrcp.pop %v391
    %v407 = vmul.f32 1.0, %v406
    %408 = vst [vmem:[#allocation8] sm:$0xff] %v393
    %409 = vst [vmem:[#allocation8 + $0x8] sm:$0xff] %v395
    %410 = vst [vmem:[#allocation8 + $0x10] sm:$0xff] %v397
    %411 = vst [vmem:[#allocation8 + $0x18] sm:$0xff] %v399
    %412 = vst [vmem:[#allocation8 + $0x20] sm:$0xff] %v401
    %413 = vst [vmem:[#allocation8 + $0x28] sm:$0xff] %v403
    %414 = vst [vmem:[#allocation8 + $0x30] sm:$0xff] %v405
    %415 = vst [vmem:[#allocation8 + $0x38] sm:$0xff] %v407
    // Predicated region
    $region26: #{tpu_custom_call.1} parent=1 // pred_check
      _
    $region27: #{tpu_custom_call.1} parent=1 // pred_check_branch
      %417 = sbr.rel (0) target = $region29
    $region28: #{tpu_custom_call.1} parent=1 // pred_region
      %s419 = ssub.s32 1024, 1024
      %420 = vsyncadd [#allocation4], %s419
      %s422 = sshll.u32 [#allocation8], 4
      %s423 = int_to_ptr.vmem [resolvable:$true] %s422
      %425 = dma.vmem_to_hbm [thread:$0]  %s423, 1024, %s3, [#allocation4]
    $region29: #{tpu_custom_call.1} parent=1 // pred_fallthru
      _
    // Predicated region
    $region30: #{tpu_custom_call.1} parent=1 // pred_check
      _
    $region31: #{tpu_custom_call.1} parent=1 // pred_check_branch
      %427 = sbr.rel (0) target = $region33
    $region32: #{tpu_custom_call.1} parent=1 // pred_region
      %428 = dma.done [#allocation4], 1024
    $region33: #{tpu_custom_call.1} parent=1 // pred_fallthru
      _
    %429 = vsyncpa [#allocation3], 1
    %430 = vsyncpa [#allocation6], 1
    %431 = vsyncpa [#allocation4], 1

</llo_original>
